<compile_context>
chip_gen: v7x
topology: tpu7x:2x2x1
jax: 0.10.0
libtpu: 0.0.40
codegen_flags: <defaults>
</compile_context>

<pallas_src>
import functools

import numpy as np
import jax
import jax.numpy as jnp
from jax.experimental import pallas as pl
from jax.experimental.pallas import tpu as pltpu


_VMEM_LIMIT = 32 * 1024 * 1024      # safe scoped limit on v5e/v6e/v7x
_BLOCK_BUDGET = 12 * 1024 * 1024    # target for double-buffered in/out blocks
_CHUNK = 128                        # pooled outputs per inner chunk (lane width)


def _pool_matrix(span, n_out, stride, kernel_size):
    """P[t, i] = 1/K if t lies inside pooling window i (chunk-local), else 0."""
    t = np.arange(span)[:, None]
    i = np.arange(n_out)[None, :]
    win = (t >= i * stride) & (t < i * stride + kernel_size)
    return jnp.asarray(win.astype(np.float32) / float(kernel_size),
                       dtype=jnp.bfloat16)


def _aligned_kernel(x_ref, w_ref, b_ref, p_ref, o_ref, *, l_block, stride, chunk):
    """Fast path (kernel_size <= stride, T % stride == 0).

    x_ref: (1, Cin, l_block*stride) f32   input slice (NCW layout)
    w_ref: (H, Cin)                 bf16  conv weight
    b_ref: (H, 1)                   f32   conv bias
    p_ref: (chunk*stride, chunk)    bf16  constant per-chunk pooling matrix
    o_ref: (1, H, l_block)          f32   pooled output block
    """
    n_chunks = -(-l_block // chunk)
    for c in range(n_chunks):                       # static unroll; y stays chunk-sized
        n_c = min(chunk, l_block - c * chunk)
        t0 = c * chunk * stride
        x_c = x_ref[0, :, t0:t0 + n_c * stride]     # (Cin, n_c*stride) f32
        y = jnp.dot(w_ref[...], x_c.astype(jnp.bfloat16),
                    preferred_element_type=jnp.float32)      # 1x1 conv on the MXU
        y = jnp.maximum(y + b_ref[...], 0.0)                  # bias + ReLU (f32)
        o_ref[0, :, c * chunk:c * chunk + n_c] = jnp.dot(
            y.astype(jnp.bfloat16), p_ref[:n_c * stride, :n_c],
            preferred_element_type=jnp.float32)               # small pool matmul


def _general_kernel(x_ref, w_ref, b_ref, p_ref, o_ref, *, stride, chunk, span,
                    n_chunks):
    """Overlapping-window / ragged-T path; x is zero-padded so every static
    chunk read of `span` lanes is in-bounds."""
    for c in range(n_chunks):
        t0 = c * chunk * stride
        x_c = x_ref[0, :, t0:t0 + span]
        y = jnp.dot(w_ref[...], x_c.astype(jnp.bfloat16),
                    preferred_element_type=jnp.float32)
        y = jnp.maximum(y + b_ref[...], 0.0)
        o_ref[0, :, c * chunk:(c + 1) * chunk] = jnp.dot(
            y.astype(jnp.bfloat16), p_ref[...],
            preferred_element_type=jnp.float32)


def _pick_l_block(L, stride, cin, hidden, batch):
    """Largest lane-dense (multiple-of-128) pooled block dividing L whose
    double-buffered input + output blocks fit the VMEM budget."""
    cands = [blk for blk in range(1024, 127, -128) if L % blk == 0]

    def fits(blk):
        # 2x f32 input block + 2x f32 output block (pool const / y chunk are tiny)
        return 2 * cin * blk * stride * 4 + 2 * hidden * blk * 4 <= _BLOCK_BUDGET

    good = [blk for blk in cands if fits(blk)]
    if batch == 1:                      # v7x megacore: keep >= 2 parallel grid steps
        multi = [blk for blk in good if L // blk >= 2]
        if multi:
            return multi[0]
    if good:
        return good[0]
    return L                            # small L (or no 128-multiple divisor): one block


def frame_avg_pool(x, weight, bias, *, kernel_size, stride):
    """FrameAvgPool forward: relu(conv1d_1x1(x)) -> avg_pool1d(kernel, stride).

    x:      (B, Cin, T) f32, PyTorch NCW convention
    weight: (H, Cin)    f32  (PyTorch Conv1d weight with the k=1 axis squeezed)
    bias:   (H,)        f32
    returns (B, H, L)   f32, L = (T - kernel_size)//stride + 1
    """
    B, Cin, T = x.shape
    H, Cin_w = weight.shape
    assert Cin == Cin_w
    assert T >= kernel_size
    L = (T - kernel_size) // stride + 1

    w_bf16 = weight.astype(jnp.bfloat16)            # cast once, outside the grid
    b_col = bias.reshape(H, 1).astype(jnp.float32)

    if kernel_size <= stride and T % stride == 0:
        # Fast path: non-overlapping, block-aligned pooling windows.
        l_block = _pick_l_block(L, stride, Cin, H, B)
        t_block = l_block * stride
        chunk = min(_CHUNK, l_block)
        pool = _pool_matrix(chunk * stride, chunk, stride, kernel_size)
        kernel = functools.partial(_aligned_kernel, l_block=l_block,
                                   stride=stride, chunk=chunk)
        return pl.pallas_call(
            kernel,
            out_shape=jax.ShapeDtypeStruct((B, H, L), jnp.float32),
            grid=(B, L // l_block),
            in_specs=[
                pl.BlockSpec((1, Cin, t_block), lambda b, j: (b, 0, j)),
                pl.BlockSpec((H, Cin), lambda b, j: (0, 0)),
                pl.BlockSpec((H, 1), lambda b, j: (0, 0)),
                pl.BlockSpec(pool.shape, lambda b, j: (0, 0)),
            ],
            out_specs=pl.BlockSpec((1, H, l_block), lambda b, j: (b, 0, j)),
            compiler_params=pltpu.CompilerParams(
                dimension_semantics=("parallel", "parallel"),
                vmem_limit_bytes=_VMEM_LIMIT),
        )(x, w_bf16, b_col, pool)

    # General path: overlapping windows (kernel_size > stride) or T % stride != 0.
    # Pool each 128-output chunk against a small (span, chunk) matrix; x is
    # zero-padded so every static chunk slice is in-bounds (padding never
    # touches valid output windows by definition of L).
    # TODO(synk): tile the T axis for very long sequences instead of holding a
    # full (Cin, T_pad) block per batch item.
    chunk = min(_CHUNK, L)
    n_chunks = -(-L // chunk)
    L_pad = n_chunks * chunk
    span = (chunk - 1) * stride + kernel_size
    span = -(-span // 128) * 128                    # lane-aligned chunk reads
    T_pad = max(T, (n_chunks - 1) * chunk * stride + span)
    if T_pad > T:
        x = jnp.pad(x, ((0, 0), (0, 0), (0, T_pad - T)))
    pool = _pool_matrix(span, chunk, stride, kernel_size)
    kernel = functools.partial(_general_kernel, stride=stride, chunk=chunk,
                               span=span, n_chunks=n_chunks)
    out = pl.pallas_call(
        kernel,
        out_shape=jax.ShapeDtypeStruct((B, H, L_pad), jnp.float32),
        grid=(B,),
        in_specs=[
            pl.BlockSpec((1, Cin, T_pad), lambda b: (b, 0, 0)),
            pl.BlockSpec((H, Cin), lambda b: (0, 0)),
            pl.BlockSpec((H, 1), lambda b: (0, 0)),
            pl.BlockSpec(pool.shape, lambda b: (0, 0)),
        ],
        out_specs=pl.BlockSpec((1, H, L_pad), lambda b: (b, 0, 0)),
        compiler_params=pltpu.CompilerParams(
            dimension_semantics=("parallel",),
            vmem_limit_bytes=_VMEM_LIMIT),
    )(x, w_bf16, b_col, pool)
    return out[:, :, :L] if L_pad != L else out


def reference_forward(x, weight, bias, *, kernel_size, stride):
    """Pure-JAX port of the PyTorch forward (for checking)."""
    vis = jax.nn.relu(jnp.einsum('hc,bct->bht', weight, x)
                      + bias.reshape(1, -1, 1))
    T = x.shape[-1]
    L = (T - kernel_size) // stride + 1
    cols = [vis[:, :, l * stride:l * stride + kernel_size].mean(axis=-1)
            for l in range(L)]
    return jnp.stack(cols, axis=-1)


if __name__ == "__main__":
    key = jax.random.PRNGKey(0)
    cases = [
        # (B, Cin, T, H, kernel_size, stride)
        (2, 16, 16, 32, 4, 4),     # tiny: single block per batch item
        (2, 16, 512, 32, 4, 4),    # lane-dense blocked fast path
        (2, 16, 768, 32, 3, 4),    # kernel_size < stride
        (2, 16, 64, 32, 8, 4),     # overlapping windows -> general path
        (2, 16, 70, 32, 4, 4),     # ragged T (T % stride != 0) -> general path
    ]
    for (B, CIN, T, H, K, S) in cases:
        key, kx, kw, kb = jax.random.split(key, 4)
        x = jax.random.normal(kx, (B, CIN, T), jnp.float32)
        w = jax.random.normal(kw, (H, CIN), jnp.float32) / jnp.sqrt(float(CIN))
        b = 0.1 * jax.random.normal(kb, (H,), jnp.float32)

        fwd = jax.jit(functools.partial(frame_avg_pool,
                                        kernel_size=K, stride=S))
        out = fwd(x, w, b)
        jax.block_until_ready(out)

        ref = jax.jit(functools.partial(reference_forward,
                                        kernel_size=K, stride=S))(x, w, b)
        L_out = (T - K) // S + 1
        assert out.shape == (B, H, L_out), out.shape
        max_err = float(jnp.max(jnp.abs(out - ref)))
        assert jnp.allclose(out, ref, atol=3e-2, rtol=3e-2), max_err
    print("KERNEL_OK")
</pallas_src>

<mosaic_0001>
module attributes {stable_mosaic.version = 11 : i64} {
  func.func @_aligned_kernel(%arg0: i32, %arg1: i32, %arg2: memref<1x16x16xf32, #tpu.memory_space<vmem>>, %arg3: memref<32x16xbf16, #tpu.memory_space<vmem>>, %arg4: memref<32x1xf32, #tpu.memory_space<vmem>>, %arg5: memref<16x4xbf16, #tpu.memory_space<vmem>>, %arg6: memref<1x32x4xf32, #tpu.memory_space<vmem>>) attributes {dimension_semantics = [#tpu.dimension_semantics<parallel>, #tpu.dimension_semantics<parallel>], iteration_bounds = array<i64: 2, 1>, scalar_prefetch = 0 : i64, scratch_operands = 0 : i64, tpu.core_type = #tpu.core_type<tc>, window_params = [{transform_indices = @transform_0, window_bounds = array<i64: 1, 16, 16>}, {pipeline_mode = #tpu.pipeline_mode<synchronous>, transform_indices = @transform_1, window_bounds = array<i64: 32, 16>}, {pipeline_mode = #tpu.pipeline_mode<synchronous>, transform_indices = @transform_2, window_bounds = array<i64: 32, 1>}, {pipeline_mode = #tpu.pipeline_mode<synchronous>, transform_indices = @transform_3, window_bounds = array<i64: 16, 4>}, {transform_indices = @transform_4, window_bounds = array<i64: 1, 32, 4>}]} {
    %c0 = arith.constant 0 : index
    %c0_0 = arith.constant 0 : index
    %c0_1 = arith.constant 0 : index
    %0 = vector.load %arg2[%c0, %c0_0, %c0_1] : memref<1x16x16xf32, #tpu.memory_space<vmem>>, vector<1x16x16xf32>
    %1 = vector.shape_cast %0 : vector<1x16x16xf32> to vector<16x16xf32>
    %c0_2 = arith.constant 0 : index
    %c0_3 = arith.constant 0 : index
    %2 = vector.load %arg3[%c0_2, %c0_3] : memref<32x16xbf16, #tpu.memory_space<vmem>>, vector<32x16xbf16>
    %3 = arith.truncf %1 : vector<16x16xf32> to vector<16x16xbf16>
    %cst = arith.constant dense<0.000000e+00> : vector<32x16xf32>
    %4 = tpu.matmul %2, %3, %cst {dimension_numbers = #tpu.dot_dimension_numbers<[1], [0], [0], [1], [0, 0, 1, 1], [], []>} : vector<32x16xbf16>, vector<16x16xbf16>, vector<32x16xf32> -> vector<32x16xf32>
    %c0_4 = arith.constant 0 : index
    %c0_5 = arith.constant 0 : index
    %5 = vector.load %arg4[%c0_4, %c0_5] : memref<32x1xf32, #tpu.memory_space<vmem>>, vector<32x1xf32>
    %6 = vector.broadcast %5 : vector<32x1xf32> to vector<32x16xf32>
    %7 = arith.addf %4, %6 : vector<32x16xf32>
    %cst_6 = arith.constant 0.000000e+00 : f32
    %8 = vector.broadcast %cst_6 : f32 to vector<32x16xf32>
    %9 = arith.maximumf %7, %8 : vector<32x16xf32>
    %10 = arith.truncf %9 : vector<32x16xf32> to vector<32x16xbf16>
    %c0_7 = arith.constant 0 : index
    %c0_8 = arith.constant 0 : index
    %11 = vector.load %arg5[%c0_7, %c0_8] : memref<16x4xbf16, #tpu.memory_space<vmem>>, vector<16x4xbf16>
    %cst_9 = arith.constant dense<0.000000e+00> : vector<32x4xf32>
    %12 = tpu.matmul %10, %11, %cst_9 {dimension_numbers = #tpu.dot_dimension_numbers<[1], [0], [0], [1], [0, 0, 1, 1], [], []>} : vector<32x16xbf16>, vector<16x4xbf16>, vector<32x4xf32> -> vector<32x4xf32>
    %c0_10 = arith.constant 0 : index
    %c0_11 = arith.constant 0 : index
    %c0_12 = arith.constant 0 : index
    %13 = vector.load %arg6[%c0_10, %c0_11, %c0_12] : memref<1x32x4xf32, #tpu.memory_space<vmem>>, vector<1x32x4xf32>
    %14 = vector.shape_cast %13 : vector<1x32x4xf32> to vector<32x4xf32>
    %15 = vector.shape_cast %12 : vector<32x4xf32> to vector<1x32x4xf32>
    tpu.vector_store %arg6[%c0_10, %c0_11, %c0_12], %15 {strides = array<i32>} : memref<1x32x4xf32, #tpu.memory_space<vmem>>, vector<1x32x4xf32>,
    return
  }
  func.func @transform_0(%arg0: i32, %arg1: i32) -> (i32, i32, i32) {
    %c0_i32 = arith.constant 0 : i32
    %c0_i32_0 = arith.constant 0 : i32
    return %arg0, %c0_i32, %arg1 : i32, i32, i32
  }
  func.func @transform_1(%arg0: i32, %arg1: i32) -> (i32, i32) {
    %c0_i32 = arith.constant 0 : i32
    %c0_i32_0 = arith.constant 0 : i32
    %c0_i32_1 = arith.constant 0 : i32
    return %c0_i32, %c0_i32_0 : i32, i32
  }
  func.func @transform_2(%arg0: i32, %arg1: i32) -> (i32, i32) {
    %c0_i32 = arith.constant 0 : i32
    %c0_i32_0 = arith.constant 0 : i32
    %c0_i32_1 = arith.constant 0 : i32
    return %c0_i32, %c0_i32_0 : i32, i32
  }
  func.func @transform_3(%arg0: i32, %arg1: i32) -> (i32, i32) {
    %c0_i32 = arith.constant 0 : i32
    %c0_i32_0 = arith.constant 0 : i32
    %c0_i32_1 = arith.constant 0 : i32
    return %c0_i32, %c0_i32_0 : i32, i32
  }
  func.func @transform_4(%arg0: i32, %arg1: i32) -> (i32, i32, i32) {
    %c0_i32 = arith.constant 0 : i32
    %c0_i32_0 = arith.constant 0 : i32
    return %arg0, %c0_i32, %arg1 : i32, i32, i32
  }
}

</mosaic_0001>

<llo_original>
// kernel: frame_avg_pool.1
$region0: #{frame_avg_pool.1}
  #allocation0 [shape = 'u32[]', space=smem, size = 0x4, offset = 0x4, fixed_abs, tag = 'smem constant byte address 0x4 - core index']
  #allocation1 [shape = 'u32[144,128]{1,0:T(1,128)}', space=vmem, size = 0x12000, scoped, tag = 'internal scratch']
  %s0 = inlined_call_operand.vmem [shape: f32[2,16,16], index: 0, kind: input, shape index: {}]
  %s1 = inlined_call_operand.vmem [shape: bf16[32,16], index: 1, kind: input, shape index: {}]
  %s2 = inlined_call_operand.vmem [shape: f32[32,1], index: 2, kind: input, shape index: {}]
  %s3 = inlined_call_operand.vmem [shape: bf16[16,4], index: 3, kind: input, shape index: {}]
  %s4 = inlined_call_operand.vmem [shape: f32[2,32,4], index: 4, kind: output, shape index: {}]
  %s5 = sld [smem:[#allocation0]]
  $region49: #{frame_avg_pool.1} parent=0
    _
  %s7 = ssub.s32 1, %s5
  %s8 = scalar_select 0, %s7, %s5
  loop: start=0, step=1, limit=4
  $region2: #{frame_avg_pool.1} parent=0 // loop_pre_header
    _
  $region3: #{frame_avg_pool.1} parent=0 // loop_header
    %s10 = sphi 0, %s14
    %p11 = scmp.ge.s32.totalorder %s10, 4
    %s17 = sphi 0, %s29
    %s18 = sphi 0, %s25
    %s19 = sphi 0, %s17
    %s20 = sphi 0, %s18
    %s21 = sphi 0, %s19
    %s22 = sphi 0, %s20
    %s34 = sphi 0, %s36
    %s37 = sphi 0, %s34
    %s38 = sphi 0, %s37
    %s54 = sphi 0, %s38
    %s58 = sphi 0, %s58
    %s60 = sphi 0, %s58
    %s61 = sphi 0, %s60
    %s75 = sphi 0, %s61
    %s79 = sphi 0, %s79
    %s81 = sphi 0, %s79
    %s82 = sphi 0, %s81
    %s96 = sphi 0, %s82
    %s100 = sphi 0, %s100
    %s102 = sphi 0, %s100
    %s103 = sphi 0, %s102
    %s117 = sphi 0, %s103
    %s125 = sphi 0, %s127
    %s128 = sphi 0, %s125
    %s129 = sphi 0, %s128
    %s145 = sphi 0, %s129
  $region4: #{frame_avg_pool.1} parent=0 // loop_header_branch
    %13 = sbr.rel (%p11) target = $region8
  $region5: #{frame_avg_pool.1} parent=0 // loop_body
    %s15 = ssub.s32 %s10, 1
    %s16 = ssub.s32 %s10, 2
    %s23 = sadd.s32 1, %s18
    %p24 = scmp.ge.s32.totalorder %s23, 1
    %s25 = scalar_select %p24, 0, %s23
    %s26 = sadd.s32 1, %s17
    %s27 = scalar_select %p24, %s26, %s17
    %p28 = scmp.ge.s32.totalorder %s27, 2
    %s29 = scalar_select %p28, 0, %s27
    %s30 = ssub.s32 %s17, %s29
    %s31 = ssub.s32 %s18, %s25
    %s32 = sor.u32 %s30, %s31
    %p33 = scmp.eq.s32.totalorder %s32, 0
    %s35 = sadd.s32 %s34, 1
    %s36 = scalar_select %p33, %s34, %s35
    %p39 = pneg %p33
    %p40 = scmp.eq.s32.totalorder %s10, 1
    %p41 = por %p39, %p40
    %p42 = scmp.ne.s32.totalorder %s34, %s37
    %p43 = scmp.eq.s32.totalorder %s10, 0
    %p44 = por %p42, %p43
    %p45 = scmp.ne.s32.totalorder %s34, %s37
    %p46 = scmp.eq.s32.totalorder %s15, 1
    %p47 = por %p45, %p46
    %p48 = scmp.ne.s32.totalorder %s37, %s38
    %p49 = scmp.eq.s32.totalorder %s15, 0
    %p50 = por %p48, %p49
    %p51 = scmp.ne.s32.totalorder %s37, %s38
    %p52 = scmp.eq.s32.totalorder %s16, 1
    %p53 = por %p51, %p52
    %p55 = scmp.ne.s32.totalorder %s38, %s54
    %p56 = scmp.eq.s32.totalorder %s16, 0
    %p57 = por %p55, %p56
    %s59 = sadd.s32 %s58, 1
    %p62 = scmp.eq.s32.totalorder %s10, 1
    %p63 = scmp.ne.s32.totalorder %s58, %s60
    %p64 = scmp.eq.s32.totalorder %s10, 0
    %p65 = por %p63, %p64
    %p66 = scmp.ne.s32.totalorder %s58, %s60
    %p67 = scmp.eq.s32.totalorder %s15, 1
    %p68 = por %p66, %p67
    %p69 = scmp.ne.s32.totalorder %s60, %s61
    %p70 = scmp.eq.s32.totalorder %s15, 0
    %p71 = por %p69, %p70
    %p72 = scmp.ne.s32.totalorder %s60, %s61
    %p73 = scmp.eq.s32.totalorder %s16, 1
    %p74 = por %p72, %p73
    %p76 = scmp.ne.s32.totalorder %s61, %s75
    %p77 = scmp.eq.s32.totalorder %s16, 0
    %p78 = por %p76, %p77
    %s80 = sadd.s32 %s79, 1
    %p83 = scmp.eq.s32.totalorder %s10, 1
    %p84 = scmp.ne.s32.totalorder %s79, %s81
    %p85 = scmp.eq.s32.totalorder %s10, 0
    %p86 = por %p84, %p85
    %p87 = scmp.ne.s32.totalorder %s79, %s81
    %p88 = scmp.eq.s32.totalorder %s15, 1
    %p89 = por %p87, %p88
    %p90 = scmp.ne.s32.totalorder %s81, %s82
    %p91 = scmp.eq.s32.totalorder %s15, 0
    %p92 = por %p90, %p91
    %p93 = scmp.ne.s32.totalorder %s81, %s82
    %p94 = scmp.eq.s32.totalorder %s16, 1
    %p95 = por %p93, %p94
    %p97 = scmp.ne.s32.totalorder %s82, %s96
    %p98 = scmp.eq.s32.totalorder %s16, 0
    %p99 = por %p97, %p98
    %s101 = sadd.s32 %s100, 1
    %p104 = scmp.eq.s32.totalorder %s10, 1
    %p105 = scmp.ne.s32.totalorder %s100, %s102
    %p106 = scmp.eq.s32.totalorder %s10, 0
    %p107 = por %p105, %p106
    %p108 = scmp.ne.s32.totalorder %s100, %s102
    %p109 = scmp.eq.s32.totalorder %s15, 1
    %p110 = por %p108, %p109
    %p111 = scmp.ne.s32.totalorder %s102, %s103
    %p112 = scmp.eq.s32.totalorder %s15, 0
    %p113 = por %p111, %p112
    %p114 = scmp.ne.s32.totalorder %s102, %s103
    %p115 = scmp.eq.s32.totalorder %s16, 1
    %p116 = por %p114, %p115
    %p118 = scmp.ne.s32.totalorder %s103, %s117
    %p119 = scmp.eq.s32.totalorder %s16, 0
    %p120 = por %p118, %p119
    %s121 = ssub.s32 %s17, %s29
    %s122 = ssub.s32 %s18, %s25
    %s123 = sor.u32 %s121, %s122
    %p124 = scmp.eq.s32.totalorder %s123, 0
    %s126 = sadd.s32 %s125, 1
    %s127 = scalar_select %p124, %s125, %s126
    %p130 = pneg %p124
    %p131 = scmp.eq.s32.totalorder %s10, 1
    %p132 = por %p130, %p131
    %p133 = scmp.ne.s32.totalorder %s125, %s128
    %p134 = scmp.eq.s32.totalorder %s10, 0
    %p135 = por %p133, %p134
    %p136 = scmp.ne.s32.totalorder %s125, %s128
    %p137 = scmp.eq.s32.totalorder %s15, 1
    %p138 = por %p136, %p137
    %p139 = scmp.ne.s32.totalorder %s128, %s129
    %p140 = scmp.eq.s32.totalorder %s15, 0
    %p141 = por %p139, %p140
    %p142 = scmp.ne.s32.totalorder %s128, %s129
    %p143 = scmp.eq.s32.totalorder %s16, 1
    %p144 = por %p142, %p143
    %p146 = scmp.ne.s32.totalorder %s129, %s145
    %p147 = scmp.eq.s32.totalorder %s16, 0
    %p148 = por %p146, %p147
    %p149 = scmp.le.s32.totalorder 1, %s10
    %p150 = scmp.lt.s32.totalorder %s10, 3
    %p151 = pnand %p149, %p150
    %p152 = pneg %p151
    // Predicated region
    $region9: #{frame_avg_pool.1} parent=5 // pred_check
      _
    $region10: #{frame_avg_pool.1} parent=5 // pred_check_branch
      %154 = sbr.rel (%p151) target = $region12
    $region11: #{frame_avg_pool.1} parent=5 // pred_region
      %s155 = ssub.s32 %s10, 1
      // Predicated region
      $region13: #{frame_avg_pool.1} parent=11 // pred_check
        %p156 = pneg %p71
      $region14: #{frame_avg_pool.1} parent=11 // pred_check_branch
        %158 = sbr.rel (%p156) target = $region16
      $region15: #{frame_avg_pool.1} parent=11 // pred_region
        _
      $region16: #{frame_avg_pool.1} parent=11 // pred_fallthru
        _
      // Predicated region
      $region17: #{frame_avg_pool.1} parent=11 // pred_check
        %p159 = pneg %p92
      $region18: #{frame_avg_pool.1} parent=11 // pred_check_branch
        %161 = sbr.rel (%p159) target = $region20
      $region19: #{frame_avg_pool.1} parent=11 // pred_region
        _
      $region20: #{frame_avg_pool.1} parent=11 // pred_fallthru
        _
      // Predicated region
      $region21: #{frame_avg_pool.1} parent=11 // pred_check
        %p162 = pneg %p113
      $region22: #{frame_avg_pool.1} parent=11 // pred_check_branch
        %164 = sbr.rel (%p162) target = $region24
      $region23: #{frame_avg_pool.1} parent=11 // pred_region
        _
      $region24: #{frame_avg_pool.1} parent=11 // pred_fallthru
        _
    $region12: #{frame_avg_pool.1} parent=5 // pred_fallthru
      _
    %p165 = scmp.lt.s32.totalorder %s10, 2
    // Predicated region
    $region25: #{frame_avg_pool.1} parent=5 // pred_check
      %p166 = pneg %p165
    $region26: #{frame_avg_pool.1} parent=5 // pred_check_branch
      %168 = sbr.rel (%p166) target = $region28
    $region27: #{frame_avg_pool.1} parent=5 // pred_region
      // Predicated region
      $region29: #{frame_avg_pool.1} parent=27 // pred_check
        %p169 = pneg %p44
      $region30: #{frame_avg_pool.1} parent=27 // pred_check_branch
        %171 = sbr.rel (%p169) target = $region32
      $region31: #{frame_avg_pool.1} parent=27 // pred_region
        %p172 = scmp.lt.s32.totalorder %s17, 1
        %s173 = scalar_select %p172, %s17, 1
        %p174 = scmp.lt.s32.totalorder %s18, 0
        %s175 = scalar_select %p174, %s18, 0
        %s176 = smul.addr %s173, 2
        %s177 = sadd.s32 %s175, %s176
        %s178 = smul.addr %s177, 8
        %s179 = scalar_lea.vmem %s0, %s178
      $region32: #{frame_avg_pool.1} parent=27 // pred_fallthru
        _
    $region28: #{frame_avg_pool.1} parent=5 // pred_fallthru
      _
    %p180 = scmp.le.s32.totalorder 1, %s10
    %p181 = scmp.lt.s32.totalorder %s10, 3
    %p182 = pnand %p180, %p181
    %p183 = pneg %p182
    // Predicated region
    $region33: #{frame_avg_pool.1} parent=5 // pred_check
      _
    $region34: #{frame_avg_pool.1} parent=5 // pred_check_branch
      %185 = sbr.rel (%p182) target = $region36
    $region35: #{frame_avg_pool.1} parent=5 // pred_region
      %s186 = ssub.s32 %s10, 1
      %p187 = scmp.lt.s32.totalorder %s19, 1
      %s188 = scalar_select %p187, %s19, 1
      %p189 = scmp.lt.s32.totalorder %s20, 0
      %s190 = scalar_select %p189, %s20, 0
      %s191 = smul.addr %s188, 2
      %s192 = sadd.s32 %s190, %s191
      %s193 = smul.addr %s192, 8
      %s194 = scalar_lea.vmem %s0, %s193
      %p195 = pneg %p50
      %p196 = pneg %p47
      %p197 = pneg %p71
      %p198 = pneg %p68
      %p199 = pneg %p92
      %p200 = pneg %p89
      %p201 = pneg %p113
      %p202 = pneg %p110
      %p203 = pneg %p141
      %p204 = pneg %p138
      %p205 = scmp.lt.s32.totalorder %s19, 1
      %s206 = scalar_select %p205, %s19, 1
      %p207 = scmp.lt.s32.totalorder %s20, 0
      %s208 = scalar_select %p207, %s20, 0
      %s209 = smul.addr %s206, 4
      %s210 = sadd.s32 %s208, %s209
      %s211 = smul.addr %s210, 8
      %s212 = scalar_lea.vmem %s4, %s211
      %p213 = scmp.lt.s32.totalorder %s19, 1
      %s214 = scalar_select %p213, %s19, 1
      %p215 = scmp.lt.s32.totalorder %s20, 0
      %s216 = scalar_select %p215, %s20, 0
      %s217 = smul.addr %s214, 2
      %s218 = sadd.s32 %s216, %s217
      %s219 = smul.addr %s218, 8
      %s220 = scalar_lea.vmem %s0, %s219
      %p221 = scmp.lt.s32.totalorder %s19, 1
      %s222 = scalar_select %p221, %s19, 1
      %p223 = scmp.lt.s32.totalorder %s20, 0
      %s224 = scalar_select %p223, %s20, 0
      %s225 = smul.addr %s222, 4
      %s226 = sadd.s32 %s224, %s225
      %s227 = smul.addr %s226, 8
      %s228 = scalar_lea.vmem %s4, %s227
      %v230 = vld [vmem:[%s220] sm:$0xff]
      %v231 = vld [vmem:[%s220 + $0x8] sm:$0xff]
      %v232 = vld [vmem:[%s1] sm:$0xf]
      %v233 = vld [vmem:[%s1 + $0x4] sm:$0xf]
      %v234 = vld [vmem:[%s1 + $0x8] sm:$0xf]
      %v235 = vld [vmem:[%s1 + $0xc] sm:$0xf]
      %v236 = vpack.c.bf16 %v231, %v230
      %v237 = vld [vmem:[%s2] sm:$0xff]
      %v238 = vld [vmem:[%s2 + $0x8] sm:$0xff]
      %v239 = vld [vmem:[%s2 + $0x10] sm:$0xff]
      %v240 = vld [vmem:[%s2 + $0x18] sm:$0xff]
      %242 = vset.pattern.permute.xlu0 0
      %243 = vperm.xlu0 %242, %v237
      %v244 = vpop.permute.xlu0 %243
      %247 = vset.pattern.permute.xlu0 0
      %248 = vperm.xlu0 %247, %v238
      %v249 = vpop.permute.xlu0 %248
      %252 = vset.pattern.permute.xlu0 0
      %253 = vperm.xlu0 %252, %v239
      %v254 = vpop.permute.xlu0 %253
      %257 = vset.pattern.permute.xlu0 0
      %258 = vperm.xlu0 %257, %v240
      %v259 = vpop.permute.xlu0 %258
      %v265 = vunpack.c.l.b16 %v232
      %v266 = vunpack.c.l.b16 %v233
      %v267 = vunpack.c.l.b16 %v234
      %v268 = vunpack.c.l.b16 %v235
      %v269 = vpack.c.b16 %v266, %v265
      %v270 = vpack.c.b16 %v268, %v267
      %vm271 = vcmask 130048
      %v273 = vsel %vm271, %v269, 0
      %v276 = vsel %vm271, %v270, 0
      %278 = vmatprep.subr.bf16.mxu0 0
      %279 = vmatpush1.bf16.msra.mxu0 %v236
      %280 = vmatprep.subr.bf16.mxu0 0
      %281 = vmatpush1.bf16.msra.mxu0 0
      %282 = vmatprep.subr.bf16.mxu0 0
      %283 = vmatpush1.bf16.msra.mxu0 0
      %284 = vmatprep.subr.bf16.mxu0 0
      %285 = vmatpush1.bf16.msra.mxu0 0
      %286 = vmatprep.subr.bf16.mxu0 0
      %287 = vmatpush1.bf16.msra.mxu0 0
      %288 = vmatprep.subr.bf16.mxu0 0
      %289 = vmatpush1.bf16.msra.mxu0 0
      %290 = vmatprep.subr.bf16.mxu0 0
      %291 = vmatpush1.bf16.msra.mxu0 0
      %292 = vmatprep.subr.bf16.mxu0 0
      %293 = vmatpush1.bf16.msra.mxu0 0
      %294 = vmatprep.subr.bf16.mxu0 0
      %295 = vmatpush1.bf16.msra.mxu0 0
      %296 = vmatprep.subr.bf16.mxu0 0
      %297 = vmatpush1.bf16.msra.mxu0 0
      %298 = vmatprep.subr.bf16.mxu0 0
      %299 = vmatpush1.bf16.msra.mxu0 0
      %300 = vmatprep.subr.bf16.mxu0 0
      %301 = vmatpush1.bf16.msra.mxu0 0
      %302 = vmatprep.subr.bf16.mxu0 0
      %303 = vmatpush1.bf16.msra.mxu0 0
      %304 = vmatprep.subr.bf16.mxu0 0
      %305 = vmatpush1.bf16.msra.mxu0 0
      %306 = vmatprep.subr.bf16.mxu0 0
      %307 = vmatpush1.bf16.msra.mxu0 0
      %308 = vmatprep.subr.bf16.mxu0 0
      %309 = vmatpush1.bf16.msra.mxu0 0
      %310 = vmatprep.mubr.bf16.mxu0 0
      %311 = vmatmul.mubr.bf16.gmra.mrb[0].mxu0 %v273
      %v312 = vpop.f32.mrb[0].mxu0
      %v313 = vadd.f32 %v244, %v312
      %v314 = vpop.f32.mrb[0].mxu0
      %v315 = vpop.f32.mrb[0].mxu0
      %v316 = vadd.f32 %v249, %v315
      %v317 = vpop.f32.mrb[0].mxu0
      %318 = vmatprep.mubr.bf16.mxu0 0
      %319 = vmatmul.mubr.bf16.gmra.mrb[0].mxu0 %v276
      %v320 = vpop.f32.mrb[0].mxu0
      %v321 = vadd.f32 %v254, %v320
      %v322 = vpop.f32.mrb[0].mxu0
      %v323 = vpop.f32.mrb[0].mxu0
      %v324 = vadd.f32 %v259, %v323
      %v325 = vpop.f32.mrb[0].mxu0
      %326 = vdwg.mxu0
      %v327 = vmax.f32 %v313, 0.0
      %v328 = vmax.f32 %v316, 0.0
      %v329 = vmax.f32 %v321, 0.0
      %v330 = vmax.f32 %v324, 0.0
      %v331 = vpack.c.bf16 %v328, %v327
      %v332 = vpack.c.bf16 %v330, %v329
      %v333 = vld [vmem:[%s3] sm:$0xf]
      %v334 = vld [vmem:[%s3 + $0x4] sm:$0xf]
      %v337 = vunpack.c.l.b16 %v333
      %v338 = vunpack.c.l.b16 %v334
      %v339 = vpack.c.b16 %v338, %v337
      %v342 = vsel %vm271, %v331, 0
      %v345 = vsel %vm271, %v332, 0
      %347 = vmatprep.subr.bf16.mxu0 0
      %348 = vmatpush1.bf16.msra.mxu0 %v339
      %349 = vmatprep.subr.bf16.mxu0 0
      %350 = vmatpush1.bf16.msra.mxu0 0
      %351 = vmatprep.subr.bf16.mxu0 0
      %352 = vmatpush1.bf16.msra.mxu0 0
      %353 = vmatprep.subr.bf16.mxu0 0
      %354 = vmatpush1.bf16.msra.mxu0 0
      %355 = vmatprep.subr.bf16.mxu0 0
      %356 = vmatpush1.bf16.msra.mxu0 0
      %357 = vmatprep.subr.bf16.mxu0 0
      %358 = vmatpush1.bf16.msra.mxu0 0
      %359 = vmatprep.subr.bf16.mxu0 0
      %360 = vmatpush1.bf16.msra.mxu0 0
      %361 = vmatprep.subr.bf16.mxu0 0
      %362 = vmatpush1.bf16.msra.mxu0 0
      %363 = vmatprep.subr.bf16.mxu0 0
      %364 = vmatpush1.bf16.msra.mxu0 0
      %365 = vmatprep.subr.bf16.mxu0 0
      %366 = vmatpush1.bf16.msra.mxu0 0
      %367 = vmatprep.subr.bf16.mxu0 0
      %368 = vmatpush1.bf16.msra.mxu0 0
      %369 = vmatprep.subr.bf16.mxu0 0
      %370 = vmatpush1.bf16.msra.mxu0 0
      %371 = vmatprep.subr.bf16.mxu0 0
      %372 = vmatpush1.bf16.msra.mxu0 0
      %373 = vmatprep.subr.bf16.mxu0 0
      %374 = vmatpush1.bf16.msra.mxu0 0
      %375 = vmatprep.subr.bf16.mxu0 0
      %376 = vmatpush1.bf16.msra.mxu0 0
      %377 = vmatprep.subr.bf16.mxu0 0
      %378 = vmatpush1.bf16.msra.mxu0 0
      %379 = vmatprep.mubr.bf16.mxu0 0
      %380 = vmatmul.mubr.bf16.gmra.mrb[0].mxu0 %v342
      %v381 = vpop.f32.mrb[0].mxu0
      %v382 = vadd.f32 0.0, %v381
      %v383 = vpop.f32.mrb[0].mxu0
      %v384 = vpop.f32.mrb[0].mxu0
      %v385 = vadd.f32 0.0, %v384
      %v386 = vpop.f32.mrb[0].mxu0
      %387 = vmatprep.mubr.bf16.mxu0 0
      %388 = vmatmul.mubr.bf16.gmra.mrb[0].mxu0 %v345
      %v389 = vpop.f32.mrb[0].mxu0
      %v390 = vadd.f32 0.0, %v389
      %v391 = vpop.f32.mrb[0].mxu0
      %v392 = vpop.f32.mrb[0].mxu0
      %v393 = vadd.f32 0.0, %v392
      %v394 = vpop.f32.mrb[0].mxu0
      %395 = vdwg.mxu0
      %vm396 = vcmask 31744
      %397 = vst.msk [vmem:[%s228] sm:$0xff] %vm396, %v382
      %398 = vst.msk [vmem:[%s228 + $0x8] sm:$0xff] %vm396, %v385
      %399 = vst.msk [vmem:[%s228 + $0x10] sm:$0xff] %vm396, %v390
      %400 = vst.msk [vmem:[%s228 + $0x18] sm:$0xff] %vm396, %v393
      %p401 = scmp.lt.s32.totalorder %s19, 1
      %s402 = scalar_select %p401, %s19, 1
      %p403 = scmp.lt.s32.totalorder %s20, 0
      %s404 = scalar_select %p403, %s20, 0
      %s405 = smul.addr %s402, 4
      %s406 = sadd.s32 %s404, %s405
      %s407 = smul.addr %s406, 8
      %s408 = scalar_lea.vmem %s4, %s407
      // Predicated region
      $region37: #{frame_avg_pool.1} parent=35 // pred_check
        %p409 = pneg %p138
      $region38: #{frame_avg_pool.1} parent=35 // pred_check_branch
        %411 = sbr.rel (%p409) target = $region40
      $region39: #{frame_avg_pool.1} parent=35 // pred_region
        _
      $region40: #{frame_avg_pool.1} parent=35 // pred_fallthru
        _
    $region36: #{frame_avg_pool.1} parent=5 // pred_fallthru
      _
    %p412 = scmp.le.s32.totalorder 2, %s10
    // Predicated region
    $region41: #{frame_avg_pool.1} parent=5 // pred_check
      %p413 = pneg %p412
    $region42: #{frame_avg_pool.1} parent=5 // pred_check_branch
      %415 = sbr.rel (%p413) target = $region44
    $region43: #{frame_avg_pool.1} parent=5 // pred_region
      %s416 = ssub.s32 %s10, 2
      // Predicated region
      $region45: #{frame_avg_pool.1} parent=43 // pred_check
        %p417 = pneg %p144
      $region46: #{frame_avg_pool.1} parent=43 // pred_check_branch
        %419 = sbr.rel (%p417) target = $region48
      $region47: #{frame_avg_pool.1} parent=43 // pred_region
        %p420 = scmp.lt.s32.totalorder %s21, 1
        %s421 = scalar_select %p420, %s21, 1
        %p422 = scmp.lt.s32.totalorder %s22, 0
        %s423 = scalar_select %p422, %s22, 0
        %s424 = smul.addr %s421, 4
        %s425 = sadd.s32 %s423, %s424
        %s426 = smul.addr %s425, 8
        %s427 = scalar_lea.vmem %s4, %s426
      $region48: #{frame_avg_pool.1} parent=43 // pred_fallthru
        _
    $region44: #{frame_avg_pool.1} parent=5 // pred_fallthru
      _
  $region6: #{frame_avg_pool.1} parent=0 // loop_footer
    %s14 = sadd.s32 1, %s10
  $region7: #{frame_avg_pool.1} parent=0 // loop_footer_branch
    %9 = sbr.rel target = $region3
  $region8: #{frame_avg_pool.1} parent=0 // loop_exit
    _

</llo_original>
